<compile_context>
chip_gen: v7x
topology: tpu7x:2x2x1
jax: 0.10.0
libtpu: 0.0.40
codegen_flags: <defaults>
</compile_context>

<pallas_src>
import jax
import jax.numpy as jnp
import numpy as np
from jax.experimental import pallas as pl
from jax.experimental.pallas import tpu as pltpu


# The module's `config` property (metadata only, no compute).
IDENTITY_MAP_CONFIG = {"mm_projector_type": "identity"}


def identity_map(x, *args, **kwargs):
    """Faithful IdentityMap.forward(x) -> x. No kernel, no HBM traffic."""
    return x


# ----------------------------------------------------------------------------
# Explicit Pallas copies (only when an independent output buffer is required).
# ----------------------------------------------------------------------------

_MAX_TILE_BYTES = 4 * 1024 * 1024        # per-buffer tile cap (safe v5e/v6e/v7x)
_VMEM_LIMIT_BYTES = 40 * 1024 * 1024     # explicit scoped-VMEM budget
_DMA_CHUNK_MIN_BYTES = 8 * 1024 * 1024   # auto-chunk DMA copies above this size


def _copy_kernel(x_ref, o_ref):
    # Pure pass-through: copy the whole VMEM tile.
    o_ref[...] = x_ref[...]


def _plan_2d(n_elems, itemsize):
    """Pick a lane-dense (rows, cols) view and a row-tile size.

    Returns (rows, cols, tile_rows) or None if no lane-dense view exists.
    tile_rows may not divide rows; the caller uses a pl.cdiv grid so the
    (clipped) remainder block is handled by Pallas.
    """
    cols = None
    for c in (8192, 4096, 2048, 1024, 512, 256, 128):
        if n_elems % c == 0:
            cols = c
            break
    if cols is None:
        return None
    rows = n_elems // cols

    # Sublane granularity: 8 for 32-bit, 16 for bf16/f16, 32 for int8/fp8.
    sublane_mult = 8 * max(1, 4 // itemsize)

    if rows <= sublane_mult:
        # One full-extent block (block_shape == full dims is always legal).
        return rows, cols, rows

    max_rows_fit = max(
        sublane_mult,
        (_MAX_TILE_BYTES // (cols * itemsize)) // sublane_mult * sublane_mult,
    )
    candidates = [
        t for t in (32768, 16384, 8192, 4096, 2048, 1024, 512, 256, 128, 64, 32, 16, 8)
        if (t % sublane_mult == 0) and (t <= rows) and (t <= max_rows_fit)
    ]
    tile_rows = None
    for t in candidates:          # prefer an exact divisor (no remainder block)
        if rows % t == 0:
            tile_rows = t
            break
    if tile_rows is None:
        tile_rows = candidates[0] if candidates else min(rows, max_rows_fit)
    return rows, cols, tile_rows


def _tiled_lane_dense_copy(x, rows, cols, tile_rows):
    """Row-tiled, lane-dense VMEM copy of a (rows, cols) view of x."""
    x2 = x.reshape(rows, cols)    # free for a contiguous input
    grid = (pl.cdiv(rows, tile_rows),)
    y2 = pl.pallas_call(
        _copy_kernel,
        out_shape=jax.ShapeDtypeStruct((rows, cols), x.dtype),
        grid=grid,
        in_specs=[pl.BlockSpec((tile_rows, cols), lambda i: (i, 0))],
        out_specs=pl.BlockSpec((tile_rows, cols), lambda i: (i, 0)),
        compiler_params=pltpu.CompilerParams(
            dimension_semantics=("parallel",),      # shards across v7x's 2 TCs
            vmem_limit_bytes=_VMEM_LIMIT_BYTES,
        ),
    )(x2)
    return y2.reshape(x.shape)


def _fallback_tiled_copy(x):
    """Irregular (non-lane-dense) shapes: tile the leading dim, keep the last
    two dims at full extent (always legal under the (8,128) rule)."""
    itemsize = jnp.dtype(x.dtype).itemsize
    shape = x.shape

    if x.ndim < 2:
        # 0-D / irregular 1-D: single whole-array block with an explicit budget.
        # TODO(synk): chunk giant irregular 1-D arrays; projector inputs never hit this.
        return pl.pallas_call(
            _copy_kernel,
            out_shape=jax.ShapeDtypeStruct(shape, x.dtype),
            compiler_params=pltpu.CompilerParams(vmem_limit_bytes=_VMEM_LIMIT_BYTES),
        )(x)

    lead = shape[0]
    rest_bytes = int(np.prod(shape[1:])) * itemsize
    tile_lead = max(1, min(lead, _MAX_TILE_BYTES // max(1, rest_bytes)))
    if x.ndim == 2 and tile_lead < lead:
        # For 2-D the lead dim is the second-to-last: round to a sublane multiple.
        sub = 8 * max(1, 4 // itemsize)
        tile_lead = min(lead, max(sub, (tile_lead // sub) * sub)) if lead >= sub else lead

    grid = (pl.cdiv(lead, tile_lead),)
    block = (tile_lead,) + tuple(shape[1:])
    nd = x.ndim
    index_map = lambda i: (i,) + (0,) * (nd - 1)
    return pl.pallas_call(
        _copy_kernel,
        out_shape=jax.ShapeDtypeStruct(shape, x.dtype),
        grid=grid,
        in_specs=[pl.BlockSpec(block, index_map)],
        out_specs=pl.BlockSpec(block, index_map),
        compiler_params=pltpu.CompilerParams(
            dimension_semantics=("parallel",),
            vmem_limit_bytes=_VMEM_LIMIT_BYTES,
        ),
    )(x)


def _dma_chunk_plan(x, dma_chunks):
    """Static (start, size) chunks along the leading dim, or None for one DMA."""
    if x.ndim < 1 or x.shape[0] < 2:
        return None
    if dma_chunks is None:
        nbytes = x.size * jnp.dtype(x.dtype).itemsize
        if nbytes < _DMA_CHUNK_MIN_BYTES:
            return None
        dma_chunks = 4                       # 2-4 in-flight DMAs help v7x
    n = int(min(max(1, dma_chunks), x.shape[0]))
    if n <= 1:
        return None
    base, rem = divmod(x.shape[0], n)
    chunks, start = [], 0
    for c in range(n):
        size = base + (1 if c < rem else 0)
        chunks.append((start, size))
        start += size
    return chunks


def _dma_copy(x, chunks):
    """Direct HBM->HBM DMA copy: no grid, no VMEM staging."""
    n_sem = 1 if chunks is None else len(chunks)

    def kernel(x_ref, o_ref, sems):
        cps = []
        if chunks is None:
            cp = pltpu.make_async_copy(x_ref, o_ref, sems.at[0])
            cp.start()
            cps.append(cp)
        else:
            for idx, (start, size) in enumerate(chunks):
                cp = pltpu.make_async_copy(
                    x_ref.at[pl.ds(start, size)],
                    o_ref.at[pl.ds(start, size)],
                    sems.at[idx],
                )
                cp.start()
                cps.append(cp)
        for cp in cps:
            cp.wait()

    return pl.pallas_call(
        kernel,
        out_shape=jax.ShapeDtypeStruct(x.shape, x.dtype),
        in_specs=[pl.BlockSpec(memory_space=pl.ANY)],
        out_specs=pl.BlockSpec(memory_space=pl.ANY),
        scratch_shapes=[pltpu.SemaphoreType.DMA((n_sem,))],
    )(x)


def identity_map_copy(x: jax.Array, *, donate: bool = False,
                      method: str = "dma", dma_chunks=None) -> jax.Array:
    """Bit-exact copy of x via Pallas. Use only when a copy is mandated.

    donate=True: the caller gives up the input buffer, so returning x IS the
    independent result — skip the kernel entirely (an aliased self-copy would
    be two full HBM passes for nothing).
    """
    if donate:
        return x
    if x.size == 0:
        return x                                    # nothing to copy

    if method == "dma":
        return _dma_copy(x, _dma_chunk_plan(x, dma_chunks))

    # method == "tiled": VMEM round-trip copy.
    itemsize = jnp.dtype(x.dtype).itemsize
    plan = _plan_2d(x.size, itemsize)
    if plan is None:
        return _fallback_tiled_copy(x)
    rows, cols, tile_rows = plan
    return _tiled_lane_dense_copy(x, rows, cols, tile_rows)


if __name__ == "__main__":
    key = jax.random.PRNGKey(0)
    # Projector-style input: (batch=2, seq=8, hidden=32)
    x = jax.random.normal(key, (2, 8, 32), dtype=jnp.float32)
    x_np = np.asarray(x)  # golden reference

    # 1) Primary path — the true identity: returns x with zero cost.
    y_fast = identity_map(x)
    assert y_fast is x

    # 2) donate=True short-circuits the copy (no kernel launched).
    y_don = identity_map_copy(x, donate=True)
    assert y_don is x

    # 3) Tiled VMEM copy path (lane-dense (rows, cols) view).
    y_tiled = identity_map_copy(x, method="tiled")
    jax.block_until_ready(y_tiled)
    assert y_tiled.shape == x.shape and y_tiled.dtype == x.dtype
    assert np.array_equal(np.asarray(y_tiled), x_np)

    # 4) Direct HBM->HBM DMA path: single DMA, then forced 2-chunk DMAs.
    xb = jax.random.normal(jax.random.PRNGKey(1), (4, 64, 128), dtype=jnp.bfloat16)
    xb_np = np.asarray(xb)
    y_dma = identity_map_copy(xb, method="dma")
    jax.block_until_ready(y_dma)
    assert np.array_equal(np.asarray(y_dma), xb_np)
    y_dma2 = identity_map_copy(xb, method="dma", dma_chunks=2)
    jax.block_until_ready(y_dma2)
    assert np.array_equal(np.asarray(y_dma2), xb_np)

    # 5) Irregular (non-lane-dense) shape through the hardened tiled fallback.
    xc = jax.random.normal(jax.random.PRNGKey(2), (6, 16, 9), dtype=jnp.float32)
    y_fb = identity_map_copy(xc, method="tiled")
    jax.block_until_ready(y_fb)
    assert np.array_equal(np.asarray(y_fb), np.asarray(xc))

    print("KERNEL_OK")
</pallas_src>

<mosaic_0001>
module attributes {stable_mosaic.version = 11 : i64} {
  func.func @_copy_kernel(%arg0: i32, %arg1: memref<1x512xf32, #tpu.memory_space<vmem>>, %arg2: memref<1x512xf32, #tpu.memory_space<vmem>>) attributes {dimension_semantics = [#tpu.dimension_semantics<parallel>], iteration_bounds = array<i64: 1>, scalar_prefetch = 0 : i64, scratch_operands = 0 : i64, tpu.core_type = #tpu.core_type<tc>, window_params = [{transform_indices = @transform_0, window_bounds = array<i64: 1, 512>}, {transform_indices = @transform_1, window_bounds = array<i64: 1, 512>}]} {
    %c0 = arith.constant 0 : index
    %c0_0 = arith.constant 0 : index
    %0 = vector.load %arg1[%c0, %c0_0] : memref<1x512xf32, #tpu.memory_space<vmem>>, vector<1x512xf32>
    %c0_1 = arith.constant 0 : index
    %c0_2 = arith.constant 0 : index
    %1 = vector.load %arg2[%c0_1, %c0_2] : memref<1x512xf32, #tpu.memory_space<vmem>>, vector<1x512xf32>
    tpu.vector_store %arg2[%c0_1, %c0_2], %0 {strides = array<i32>} : memref<1x512xf32, #tpu.memory_space<vmem>>, vector<1x512xf32>,
    return
  }
  func.func @transform_0(%arg0: i32) -> (i32, i32) {
    %c0_i32 = arith.constant 0 : i32
    %c0_i32_0 = arith.constant 0 : i32
    return %arg0, %c0_i32 : i32, i32
  }
  func.func @transform_1(%arg0: i32) -> (i32, i32) {
    %c0_i32 = arith.constant 0 : i32
    %c0_i32_0 = arith.constant 0 : i32
    return %arg0, %c0_i32 : i32, i32
  }
}

</mosaic_0001>

<llo_original>
// kernel: tpu_custom_call.1
$region0: #{tpu_custom_call.1}
  #allocation0 [shape = 'u32[]', space=smem, size = 0x4, offset = 0x4, fixed_abs, tag = 'smem constant byte address 0x4 - core index']
  #allocation1 [shape = 'u32[144,128]{1,0:T(1,128)}', space=vmem, size = 0x12000, scoped, tag = 'internal scratch']
  %s0 = inlined_call_operand.hbm [shape: f32[1,512], index: 0, kind: input, shape index: {}]
  %s1 = inlined_call_operand.hbm [shape: f32[1,512], index: 1, kind: output, shape index: {}]
  %s2 = sld [smem:[#allocation0]]
  $region18: #{tpu_custom_call.1} parent=0
    _
  %s4 = ssub.s32 1, %s2
  %s5 = scalar_select 0, %s4, %s2
  $region1: #{tpu_custom_call.1} parent=0
    #allocation2 [shape = 'u8[2048]{0}', space=vmem, size = 0x800, scoped, tag = 'input window, operand 0, single buffered']
    #allocation3 [shape = 's32[1]{0}', space=sflag, size = 0x4, scoped, tag = 'scoped memory for tpu_custom_call.1']
    #allocation4 [shape = 's32[1]{0}', space=sflag, size = 0x4, scoped, tag = 'scoped memory for tpu_custom_call.1']
    #allocation5 [shape = 'u8[2048]{0}', space=vmem, size = 0x800, scoped, tag = 'output window, operand 0, single buffered']
    %6 = vsyncpa [#allocation3], 0
    %7 = vsyncpa [#allocation4], 0
    // Predicated region
    $region2: #{tpu_custom_call.1} parent=1 // pred_check
      _
    $region3: #{tpu_custom_call.1} parent=1 // pred_check_branch
      %9 = sbr.rel (0) target = $region5
    $region4: #{tpu_custom_call.1} parent=1 // pred_region
      %s11 = ssub.s32 64, 64
      %12 = vsyncadd [#allocation3], %s11
      %s14 = sshll.u32 [#allocation2], 4
      %s15 = int_to_ptr.vmem [resolvable:$true] %s14
      %17 = dma.hbm_to_vmem [thread:$0]  %s0, 64, %s15, [#allocation3]
    $region5: #{tpu_custom_call.1} parent=1 // pred_fallthru
      _
    // Predicated region
    $region6: #{tpu_custom_call.1} parent=1 // pred_check
      _
    $region7: #{tpu_custom_call.1} parent=1 // pred_check_branch
      %19 = sbr.rel (0) target = $region9
    $region8: #{tpu_custom_call.1} parent=1 // pred_region
      %20 = dma.done [#allocation3], 64
    $region9: #{tpu_custom_call.1} parent=1 // pred_fallthru
      _
    %v21 = vld [vmem:[#allocation2] sm:$0xf]
    %v22 = vlaneseq
    %vm23 = vcmp.ge.s32.totalorder %v22, 0
    %vm24 = vcmp.lt.s32.totalorder %v22, 512
    %vm25 = vmand %vm23, %vm24
    %26 = vst.msk [vmem:[#allocation5] sm:$0xf] %vm25, %v21
    // Predicated region
    $region10: #{tpu_custom_call.1} parent=1 // pred_check
      _
    $region11: #{tpu_custom_call.1} parent=1 // pred_check_branch
      %28 = sbr.rel (0) target = $region13
    $region12: #{tpu_custom_call.1} parent=1 // pred_region
      %s30 = ssub.s32 64, 64
      %31 = vsyncadd [#allocation4], %s30
      %s33 = sshll.u32 [#allocation5], 4
      %s34 = int_to_ptr.vmem [resolvable:$true] %s33
      %36 = dma.vmem_to_hbm [thread:$0]  %s34, 64, %s1, [#allocation4]
    $region13: #{tpu_custom_call.1} parent=1 // pred_fallthru
      _
    // Predicated region
    $region14: #{tpu_custom_call.1} parent=1 // pred_check
      _
    $region15: #{tpu_custom_call.1} parent=1 // pred_check_branch
      %38 = sbr.rel (0) target = $region17
    $region16: #{tpu_custom_call.1} parent=1 // pred_region
      %39 = dma.done [#allocation4], 64
    $region17: #{tpu_custom_call.1} parent=1 // pred_fallthru
      _
    %40 = vsyncpa [#allocation3], 1
    %41 = vsyncpa [#allocation4], 1

</llo_original>
